<compile_context>
chip_gen: v5e
topology: v5e:2x2
jax: 0.10.0
libtpu: 0.0.40
codegen_flags: <defaults>
</compile_context>

<pallas_src>
import jax
import jax.numpy as jnp
import numpy as np
from jax import lax
from jax.experimental import pallas as pl
from jax.experimental.pallas import tpu as pltpu


def _mlp_relu_kernel(nodes_ref, feat_hbm, w_ref, b_ref, o_ref, xbuf, sem):
    """One batch tile: gather rows from HBM, x @ W^T + b, ReLU.

    nodes_ref: (B_pad,) i32 in SMEM (scalar prefetch)
    feat_hbm : (N, Din) f32 in HBM (manual DMA)
    w_ref    : (Dout_p, Din) f32 in VMEM (resident across grid steps)
    b_ref    : (1, Dout_p)  f32 in VMEM (resident)
    o_ref    : (TB, Dout_p) f32 output tile
    xbuf     : (TB, Din)    f32 VMEM scratch for the gathered rows
    sem      : scalar DMA semaphore
    """
    i = pl.program_id(0)
    tb = xbuf.shape[0]
    unroll = tb <= 64

    # 1) Issue one row-copy per batch element of this tile (all async).
    def _issue(r, carry):
        node = nodes_ref[i * tb + r]
        pltpu.make_async_copy(
            feat_hbm.at[pl.ds(node, 1)],   # (1, Din) row in HBM
            xbuf.at[pl.ds(r, 1)],          # (1, Din) row in VMEM
            sem,
        ).start()
        return carry

    lax.fori_loop(0, tb, _issue, 0, unroll=unroll)

    # 2) Wait for all row DMAs (same-shaped placeholder descriptors, same sem).
    def _wait(r, carry):
        pltpu.make_async_copy(
            feat_hbm.at[pl.ds(0, 1)],
            xbuf.at[pl.ds(r, 1)],
            sem,
        ).wait()
        return carry

    lax.fori_loop(0, tb, _wait, 0, unroll=unroll)

    # 3) MXU matmul: contract x's last dim with weight's last dim (no transpose
    #    in the wrapper; weight stays in PyTorch (Dout, Din) layout).
    y = lax.dot_general(
        xbuf[...], w_ref[...],
        dimension_numbers=(((1,), (1,)), ((), ())),
        preferred_element_type=jnp.float32,
    )
    y = y + b_ref[...]                       # broadcast bias over batch rows
    o_ref[...] = jnp.maximum(y, 0.0).astype(o_ref.dtype)


def _round_up(x, m):
    return ((x + m - 1) // m) * m


def fraudre_mlp_forward(features, weight, bias, nodes, *, tile_b=128):
    """features: (N, Din) f32, weight: (Dout, Din) f32 (PyTorch layout),
    bias: (Dout,) f32, nodes: (B,) int  ->  (B, Dout) f32."""
    N, Din = features.shape
    Dout = weight.shape[0]
    B = nodes.shape[0]

    LANE, SUBLANE = 128, 8
    dout_p = _round_up(Dout, LANE)                       # lane-dense output
    tb = _round_up(min(tile_b, _round_up(B, SUBLANE)), SUBLANE)
    b_p = _round_up(B, tb)
    num_tiles = b_p // tb

    # Pad params / indices (padding sliced off after the kernel).  Padded node
    # slots use index 0, which is always a valid feature row.
    w_p = jnp.pad(weight, ((0, dout_p - Dout), (0, 0)))          # (Dout_p, Din)
    b_pad = jnp.pad(bias, (0, dout_p - Dout)).reshape(1, dout_p)  # (1, Dout_p)
    nodes_p = jnp.pad(nodes.astype(jnp.int32), (0, b_p - B))      # (B_pad,)

    grid_spec = pltpu.PrefetchScalarGridSpec(
        num_scalar_prefetch=1,                # nodes -> SMEM
        grid=(num_tiles,),
        in_specs=[
            pl.BlockSpec(memory_space=pl.ANY),                       # features (HBM)
            pl.BlockSpec((dout_p, Din), lambda i, nref: (0, 0)),     # weight, resident
            pl.BlockSpec((1, dout_p), lambda i, nref: (0, 0)),       # bias, resident
        ],
        out_specs=pl.BlockSpec((tb, dout_p), lambda i, nref: (i, 0)),
        scratch_shapes=[
            pltpu.VMEM((tb, Din), features.dtype),   # gathered rows
            pltpu.SemaphoreType.DMA(()),             # row-gather semaphore
        ],
    )

    flops = 2 * b_p * Din * dout_p
    bytes_accessed = 4 * (b_p * Din + dout_p * Din + dout_p + b_p * dout_p)

    out_p = pl.pallas_call(
        _mlp_relu_kernel,
        out_shape=jax.ShapeDtypeStruct((b_p, dout_p), jnp.float32),
        grid_spec=grid_spec,
        compiler_params=pltpu.CompilerParams(
            dimension_semantics=("parallel",),       # batch tiles are independent
        ),
        cost_estimate=pl.CostEstimate(
            flops=flops, transcendentals=0, bytes_accessed=bytes_accessed),
    )(nodes_p, features, w_p, b_pad)

    return out_p[:B, :Dout]


def _ref_forward(features, weight, bias, nodes):
    x = jnp.take(features, nodes, axis=0)
    return jnp.maximum(x @ weight.T + bias, 0.0)


if __name__ == "__main__":
    # Deterministic parameter / input construction (synthetic, no checkpoint).
    num_nodes, input_dim, output_dim, batch = 64, 16, 32, 32

    key = jax.random.PRNGKey(0)
    k_feat, k_w, k_b, k_nodes = jax.random.split(key, 4)

    # Feature table ("embedding" the module wraps).
    features = jax.random.normal(k_feat, (num_nodes, input_dim), jnp.float32)

    # nn.Linear(input_dim, output_dim) params (PyTorch-style uniform init).
    bound = 1.0 / np.sqrt(input_dim)
    weight = jax.random.uniform(k_w, (output_dim, input_dim), jnp.float32,
                                -bound, bound)
    bias = jax.random.uniform(k_b, (output_dim,), jnp.float32, -bound, bound)

    # Batch of node indices.
    nodes = jax.random.randint(k_nodes, (batch,), 0, num_nodes, jnp.int32)

    # Small tile so the demo exercises multiple grid steps (grid=(4,)).
    out = fraudre_mlp_forward(features, weight, bias, nodes, tile_b=8)
    out = jax.block_until_ready(out)

    ref = _ref_forward(features, weight, bias, nodes)
    np.testing.assert_allclose(np.asarray(out), np.asarray(ref),
                               rtol=1e-5, atol=1e-5)

    print("KERNEL_OK")
</pallas_src>

<mosaic_0001>
module attributes {stable_mosaic.version = 11 : i64} {
  func.func @_mlp_relu_kernel(%arg0: i32, %arg1: memref<32xi32, #tpu.memory_space<smem>>, %arg2: memref<64x16xf32, #tpu.memory_space<any>>, %arg3: memref<128x16xf32, #tpu.memory_space<vmem>>, %arg4: memref<1x128xf32, #tpu.memory_space<vmem>>, %arg5: memref<8x128xf32, #tpu.memory_space<vmem>>, %arg6: memref<8x16xf32, #tpu.memory_space<vmem>>, %arg7: memref<!tpu.dma_semaphore, #tpu.memory_space<semaphore_mem>>) attributes {dimension_semantics = [#tpu.dimension_semantics<parallel>], iteration_bounds = array<i64: 4>, scalar_prefetch = 1 : i64, scratch_operands = 2 : i64, tpu.core_type = #tpu.core_type<tc>, window_params = [{}, {pipeline_mode = #tpu.pipeline_mode<synchronous>, transform_indices = @transform_1, window_bounds = array<i64: 128, 16>}, {pipeline_mode = #tpu.pipeline_mode<synchronous>, transform_indices = @transform_2, window_bounds = array<i64: 1, 128>}, {transform_indices = @transform_3, window_bounds = array<i64: 8, 128>}]} {
    %c0_i32 = arith.constant 0 : i32
    %c8_i32 = arith.constant 8 : i32
    %0 = arith.muli %arg0, %c8_i32 : i32
    %1 = arith.addi %0, %c0_i32 : i32
    %2 = arith.index_cast %1 : i32 to index
    %3 = memref.load %arg1[%2] : memref<32xi32, #tpu.memory_space<smem>>
    %c0_i32_0 = arith.constant 0 : i32
    %4 = tpu.memref_slice %arg2[%3, %c0_i32_0] : memref<64x16xf32, #tpu.memory_space<any>> -> memref<1x16xf32, #tpu.memory_space<any>>
    %c0_i32_1 = arith.constant 0 : i32
    %5 = tpu.memref_slice %arg6[%c0_i32, %c0_i32_1] : memref<8x16xf32, #tpu.memory_space<vmem>> -> memref<1x16xf32, #tpu.memory_space<vmem>>
    tpu.enqueue_dma source(%4 : memref<1x16xf32, #tpu.memory_space<any>>) target(%5 : memref<1x16xf32, #tpu.memory_space<vmem>>) target_semaphore(%arg7 : memref<!tpu.dma_semaphore, #tpu.memory_space<semaphore_mem>>)
    %c1_i32 = arith.constant 1 : i32
    %c8_i32_2 = arith.constant 8 : i32
    %6 = arith.muli %arg0, %c8_i32_2 : i32
    %7 = arith.addi %6, %c1_i32 : i32
    %8 = arith.index_cast %7 : i32 to index
    %9 = memref.load %arg1[%8] : memref<32xi32, #tpu.memory_space<smem>>
    %c0_i32_3 = arith.constant 0 : i32
    %10 = tpu.memref_slice %arg2[%9, %c0_i32_3] : memref<64x16xf32, #tpu.memory_space<any>> -> memref<1x16xf32, #tpu.memory_space<any>>
    %c0_i32_4 = arith.constant 0 : i32
    %11 = tpu.memref_slice %arg6[%c1_i32, %c0_i32_4] : memref<8x16xf32, #tpu.memory_space<vmem>> -> memref<1x16xf32, #tpu.memory_space<vmem>>
    tpu.enqueue_dma source(%10 : memref<1x16xf32, #tpu.memory_space<any>>) target(%11 : memref<1x16xf32, #tpu.memory_space<vmem>>) target_semaphore(%arg7 : memref<!tpu.dma_semaphore, #tpu.memory_space<semaphore_mem>>)
    %c2_i32 = arith.constant 2 : i32
    %c8_i32_5 = arith.constant 8 : i32
    %12 = arith.muli %arg0, %c8_i32_5 : i32
    %13 = arith.addi %12, %c2_i32 : i32
    %14 = arith.index_cast %13 : i32 to index
    %15 = memref.load %arg1[%14] : memref<32xi32, #tpu.memory_space<smem>>
    %c0_i32_6 = arith.constant 0 : i32
    %16 = tpu.memref_slice %arg2[%15, %c0_i32_6] : memref<64x16xf32, #tpu.memory_space<any>> -> memref<1x16xf32, #tpu.memory_space<any>>
    %c0_i32_7 = arith.constant 0 : i32
    %17 = tpu.memref_slice %arg6[%c2_i32, %c0_i32_7] : memref<8x16xf32, #tpu.memory_space<vmem>> -> memref<1x16xf32, #tpu.memory_space<vmem>>
    tpu.enqueue_dma source(%16 : memref<1x16xf32, #tpu.memory_space<any>>) target(%17 : memref<1x16xf32, #tpu.memory_space<vmem>>) target_semaphore(%arg7 : memref<!tpu.dma_semaphore, #tpu.memory_space<semaphore_mem>>)
    %c3_i32 = arith.constant 3 : i32
    %c8_i32_8 = arith.constant 8 : i32
    %18 = arith.muli %arg0, %c8_i32_8 : i32
    %19 = arith.addi %18, %c3_i32 : i32
    %20 = arith.index_cast %19 : i32 to index
    %21 = memref.load %arg1[%20] : memref<32xi32, #tpu.memory_space<smem>>
    %c0_i32_9 = arith.constant 0 : i32
    %22 = tpu.memref_slice %arg2[%21, %c0_i32_9] : memref<64x16xf32, #tpu.memory_space<any>> -> memref<1x16xf32, #tpu.memory_space<any>>
    %c0_i32_10 = arith.constant 0 : i32
    %23 = tpu.memref_slice %arg6[%c3_i32, %c0_i32_10] : memref<8x16xf32, #tpu.memory_space<vmem>> -> memref<1x16xf32, #tpu.memory_space<vmem>>
    tpu.enqueue_dma source(%22 : memref<1x16xf32, #tpu.memory_space<any>>) target(%23 : memref<1x16xf32, #tpu.memory_space<vmem>>) target_semaphore(%arg7 : memref<!tpu.dma_semaphore, #tpu.memory_space<semaphore_mem>>)
    %c4_i32 = arith.constant 4 : i32
    %c8_i32_11 = arith.constant 8 : i32
    %24 = arith.muli %arg0, %c8_i32_11 : i32
    %25 = arith.addi %24, %c4_i32 : i32
    %26 = arith.index_cast %25 : i32 to index
    %27 = memref.load %arg1[%26] : memref<32xi32, #tpu.memory_space<smem>>
    %c0_i32_12 = arith.constant 0 : i32
    %28 = tpu.memref_slice %arg2[%27, %c0_i32_12] : memref<64x16xf32, #tpu.memory_space<any>> -> memref<1x16xf32, #tpu.memory_space<any>>
    %c0_i32_13 = arith.constant 0 : i32
    %29 = tpu.memref_slice %arg6[%c4_i32, %c0_i32_13] : memref<8x16xf32, #tpu.memory_space<vmem>> -> memref<1x16xf32, #tpu.memory_space<vmem>>
    tpu.enqueue_dma source(%28 : memref<1x16xf32, #tpu.memory_space<any>>) target(%29 : memref<1x16xf32, #tpu.memory_space<vmem>>) target_semaphore(%arg7 : memref<!tpu.dma_semaphore, #tpu.memory_space<semaphore_mem>>)
    %c5_i32 = arith.constant 5 : i32
    %c8_i32_14 = arith.constant 8 : i32
    %30 = arith.muli %arg0, %c8_i32_14 : i32
    %31 = arith.addi %30, %c5_i32 : i32
    %32 = arith.index_cast %31 : i32 to index
    %33 = memref.load %arg1[%32] : memref<32xi32, #tpu.memory_space<smem>>
    %c0_i32_15 = arith.constant 0 : i32
    %34 = tpu.memref_slice %arg2[%33, %c0_i32_15] : memref<64x16xf32, #tpu.memory_space<any>> -> memref<1x16xf32, #tpu.memory_space<any>>
    %c0_i32_16 = arith.constant 0 : i32
    %35 = tpu.memref_slice %arg6[%c5_i32, %c0_i32_16] : memref<8x16xf32, #tpu.memory_space<vmem>> -> memref<1x16xf32, #tpu.memory_space<vmem>>
    tpu.enqueue_dma source(%34 : memref<1x16xf32, #tpu.memory_space<any>>) target(%35 : memref<1x16xf32, #tpu.memory_space<vmem>>) target_semaphore(%arg7 : memref<!tpu.dma_semaphore, #tpu.memory_space<semaphore_mem>>)
    %c6_i32 = arith.constant 6 : i32
    %c8_i32_17 = arith.constant 8 : i32
    %36 = arith.muli %arg0, %c8_i32_17 : i32
    %37 = arith.addi %36, %c6_i32 : i32
    %38 = arith.index_cast %37 : i32 to index
    %39 = memref.load %arg1[%38] : memref<32xi32, #tpu.memory_space<smem>>
    %c0_i32_18 = arith.constant 0 : i32
    %40 = tpu.memref_slice %arg2[%39, %c0_i32_18] : memref<64x16xf32, #tpu.memory_space<any>> -> memref<1x16xf32, #tpu.memory_space<any>>
    %c0_i32_19 = arith.constant 0 : i32
    %41 = tpu.memref_slice %arg6[%c6_i32, %c0_i32_19] : memref<8x16xf32, #tpu.memory_space<vmem>> -> memref<1x16xf32, #tpu.memory_space<vmem>>
    tpu.enqueue_dma source(%40 : memref<1x16xf32, #tpu.memory_space<any>>) target(%41 : memref<1x16xf32, #tpu.memory_space<vmem>>) target_semaphore(%arg7 : memref<!tpu.dma_semaphore, #tpu.memory_space<semaphore_mem>>)
    %c7_i32 = arith.constant 7 : i32
    %c8_i32_20 = arith.constant 8 : i32
    %42 = arith.muli %arg0, %c8_i32_20 : i32
    %43 = arith.addi %42, %c7_i32 : i32
    %44 = arith.index_cast %43 : i32 to index
    %45 = memref.load %arg1[%44] : memref<32xi32, #tpu.memory_space<smem>>
    %c0_i32_21 = arith.constant 0 : i32
    %46 = tpu.memref_slice %arg2[%45, %c0_i32_21] : memref<64x16xf32, #tpu.memory_space<any>> -> memref<1x16xf32, #tpu.memory_space<any>>
    %c0_i32_22 = arith.constant 0 : i32
    %47 = tpu.memref_slice %arg6[%c7_i32, %c0_i32_22] : memref<8x16xf32, #tpu.memory_space<vmem>> -> memref<1x16xf32, #tpu.memory_space<vmem>>
    tpu.enqueue_dma source(%46 : memref<1x16xf32, #tpu.memory_space<any>>) target(%47 : memref<1x16xf32, #tpu.memory_space<vmem>>) target_semaphore(%arg7 : memref<!tpu.dma_semaphore, #tpu.memory_space<semaphore_mem>>)
    %c8_i32_23 = arith.constant 8 : i32
    %c0_i32_24 = arith.constant 0 : i32
    %c0_i32_25 = arith.constant 0 : i32
    %c0_i32_26 = arith.constant 0 : i32
    %48 = tpu.memref_slice %arg2[%c0_i32_25, %c0_i32_26] : memref<64x16xf32, #tpu.memory_space<any>> -> memref<1x16xf32, #tpu.memory_space<any>>
    %c0_i32_27 = arith.constant 0 : i32
    %49 = tpu.memref_slice %arg6[%c0_i32_24, %c0_i32_27] : memref<8x16xf32, #tpu.memory_space<vmem>> -> memref<1x16xf32, #tpu.memory_space<vmem>>
    tpu.wait_dma2 semaphore(%arg7 : memref<!tpu.dma_semaphore, #tpu.memory_space<semaphore_mem>>) src(%48 : memref<1x16xf32, #tpu.memory_space<any>>) dst(%49 : memref<1x16xf32, #tpu.memory_space<vmem>>)
    %c1_i32_28 = arith.constant 1 : i32
    %c0_i32_29 = arith.constant 0 : i32
    %c0_i32_30 = arith.constant 0 : i32
    %50 = tpu.memref_slice %arg2[%c0_i32_29, %c0_i32_30] : memref<64x16xf32, #tpu.memory_space<any>> -> memref<1x16xf32, #tpu.memory_space<any>>
    %c0_i32_31 = arith.constant 0 : i32
    %51 = tpu.memref_slice %arg6[%c1_i32_28, %c0_i32_31] : memref<8x16xf32, #tpu.memory_space<vmem>> -> memref<1x16xf32, #tpu.memory_space<vmem>>
    tpu.wait_dma2 semaphore(%arg7 : memref<!tpu.dma_semaphore, #tpu.memory_space<semaphore_mem>>) src(%50 : memref<1x16xf32, #tpu.memory_space<any>>) dst(%51 : memref<1x16xf32, #tpu.memory_space<vmem>>)
    %c2_i32_32 = arith.constant 2 : i32
    %c0_i32_33 = arith.constant 0 : i32
    %c0_i32_34 = arith.constant 0 : i32
    %52 = tpu.memref_slice %arg2[%c0_i32_33, %c0_i32_34] : memref<64x16xf32, #tpu.memory_space<any>> -> memref<1x16xf32, #tpu.memory_space<any>>
    %c0_i32_35 = arith.constant 0 : i32
    %53 = tpu.memref_slice %arg6[%c2_i32_32, %c0_i32_35] : memref<8x16xf32, #tpu.memory_space<vmem>> -> memref<1x16xf32, #tpu.memory_space<vmem>>
    tpu.wait_dma2 semaphore(%arg7 : memref<!tpu.dma_semaphore, #tpu.memory_space<semaphore_mem>>) src(%52 : memref<1x16xf32, #tpu.memory_space<any>>) dst(%53 : memref<1x16xf32, #tpu.memory_space<vmem>>)
    %c3_i32_36 = arith.constant 3 : i32
    %c0_i32_37 = arith.constant 0 : i32
    %c0_i32_38 = arith.constant 0 : i32
    %54 = tpu.memref_slice %arg2[%c0_i32_37, %c0_i32_38] : memref<64x16xf32, #tpu.memory_space<any>> -> memref<1x16xf32, #tpu.memory_space<any>>
    %c0_i32_39 = arith.constant 0 : i32
    %55 = tpu.memref_slice %arg6[%c3_i32_36, %c0_i32_39] : memref<8x16xf32, #tpu.memory_space<vmem>> -> memref<1x16xf32, #tpu.memory_space<vmem>>
    tpu.wait_dma2 semaphore(%arg7 : memref<!tpu.dma_semaphore, #tpu.memory_space<semaphore_mem>>) src(%54 : memref<1x16xf32, #tpu.memory_space<any>>) dst(%55 : memref<1x16xf32, #tpu.memory_space<vmem>>)
    %c4_i32_40 = arith.constant 4 : i32
    %c0_i32_41 = arith.constant 0 : i32
    %c0_i32_42 = arith.constant 0 : i32
    %56 = tpu.memref_slice %arg2[%c0_i32_41, %c0_i32_42] : memref<64x16xf32, #tpu.memory_space<any>> -> memref<1x16xf32, #tpu.memory_space<any>>
    %c0_i32_43 = arith.constant 0 : i32
    %57 = tpu.memref_slice %arg6[%c4_i32_40, %c0_i32_43] : memref<8x16xf32, #tpu.memory_space<vmem>> -> memref<1x16xf32, #tpu.memory_space<vmem>>
    tpu.wait_dma2 semaphore(%arg7 : memref<!tpu.dma_semaphore, #tpu.memory_space<semaphore_mem>>) src(%56 : memref<1x16xf32, #tpu.memory_space<any>>) dst(%57 : memref<1x16xf32, #tpu.memory_space<vmem>>)
    %c5_i32_44 = arith.constant 5 : i32
    %c0_i32_45 = arith.constant 0 : i32
    %c0_i32_46 = arith.constant 0 : i32
    %58 = tpu.memref_slice %arg2[%c0_i32_45, %c0_i32_46] : memref<64x16xf32, #tpu.memory_space<any>> -> memref<1x16xf32, #tpu.memory_space<any>>
    %c0_i32_47 = arith.constant 0 : i32
    %59 = tpu.memref_slice %arg6[%c5_i32_44, %c0_i32_47] : memref<8x16xf32, #tpu.memory_space<vmem>> -> memref<1x16xf32, #tpu.memory_space<vmem>>
    tpu.wait_dma2 semaphore(%arg7 : memref<!tpu.dma_semaphore, #tpu.memory_space<semaphore_mem>>) src(%58 : memref<1x16xf32, #tpu.memory_space<any>>) dst(%59 : memref<1x16xf32, #tpu.memory_space<vmem>>)
    %c6_i32_48 = arith.constant 6 : i32
    %c0_i32_49 = arith.constant 0 : i32
    %c0_i32_50 = arith.constant 0 : i32
    %60 = tpu.memref_slice %arg2[%c0_i32_49, %c0_i32_50] : memref<64x16xf32, #tpu.memory_space<any>> -> memref<1x16xf32, #tpu.memory_space<any>>
    %c0_i32_51 = arith.constant 0 : i32
    %61 = tpu.memref_slice %arg6[%c6_i32_48, %c0_i32_51] : memref<8x16xf32, #tpu.memory_space<vmem>> -> memref<1x16xf32, #tpu.memory_space<vmem>>
    tpu.wait_dma2 semaphore(%arg7 : memref<!tpu.dma_semaphore, #tpu.memory_space<semaphore_mem>>) src(%60 : memref<1x16xf32, #tpu.memory_space<any>>) dst(%61 : memref<1x16xf32, #tpu.memory_space<vmem>>)
    %c7_i32_52 = arith.constant 7 : i32
    %c0_i32_53 = arith.constant 0 : i32
    %c0_i32_54 = arith.constant 0 : i32
    %62 = tpu.memref_slice %arg2[%c0_i32_53, %c0_i32_54] : memref<64x16xf32, #tpu.memory_space<any>> -> memref<1x16xf32, #tpu.memory_space<any>>
    %c0_i32_55 = arith.constant 0 : i32
    %63 = tpu.memref_slice %arg6[%c7_i32_52, %c0_i32_55] : memref<8x16xf32, #tpu.memory_space<vmem>> -> memref<1x16xf32, #tpu.memory_space<vmem>>
    tpu.wait_dma2 semaphore(%arg7 : memref<!tpu.dma_semaphore, #tpu.memory_space<semaphore_mem>>) src(%62 : memref<1x16xf32, #tpu.memory_space<any>>) dst(%63 : memref<1x16xf32, #tpu.memory_space<vmem>>)
    %c8_i32_56 = arith.constant 8 : i32
    %c0 = arith.constant 0 : index
    %c0_57 = arith.constant 0 : index
    %64 = vector.load %arg6[%c0, %c0_57] : memref<8x16xf32, #tpu.memory_space<vmem>>, vector<8x16xf32>
    %c0_58 = arith.constant 0 : index
    %c0_59 = arith.constant 0 : index
    %65 = vector.load %arg3[%c0_58, %c0_59] : memref<128x16xf32, #tpu.memory_space<vmem>>, vector<128x16xf32>
    %cst = arith.constant dense<0.000000e+00> : vector<8x128xf32>
    %66 = tpu.matmul %64, %65, %cst {dimension_numbers = #tpu.dot_dimension_numbers<[1], [1], [0], [0], [0, 0, 1, 0], [], []>} : vector<8x16xf32>, vector<128x16xf32>, vector<8x128xf32> -> vector<8x128xf32>
    %c0_60 = arith.constant 0 : index
    %c0_61 = arith.constant 0 : index
    %67 = vector.load %arg4[%c0_60, %c0_61] : memref<1x128xf32, #tpu.memory_space<vmem>>, vector<1x128xf32>
    %68 = vector.broadcast %67 : vector<1x128xf32> to vector<8x128xf32>
    %69 = arith.addf %66, %68 : vector<8x128xf32>
    %cst_62 = arith.constant 0.000000e+00 : f32
    %70 = vector.broadcast %cst_62 : f32 to vector<8x128xf32>
    %71 = arith.maximumf %69, %70 : vector<8x128xf32>
    %c0_63 = arith.constant 0 : index
    %c0_64 = arith.constant 0 : index
    %72 = vector.load %arg5[%c0_63, %c0_64] : memref<8x128xf32, #tpu.memory_space<vmem>>, vector<8x128xf32>
    tpu.vector_store %arg5[%c0_63, %c0_64], %71 {strides = array<i32>} : memref<8x128xf32, #tpu.memory_space<vmem>>, vector<8x128xf32>,
    return
  }
  func.func @transform_1(%arg0: i32, %arg1: memref<32xi32, #tpu.memory_space<smem>>) -> (i32, i32) {
    %c0_i32 = arith.constant 0 : i32
    %c0_i32_0 = arith.constant 0 : i32
    %c0_i32_1 = arith.constant 0 : i32
    return %c0_i32, %c0_i32_0 : i32, i32
  }
  func.func @transform_2(%arg0: i32, %arg1: memref<32xi32, #tpu.memory_space<smem>>) -> (i32, i32) {
    %c0_i32 = arith.constant 0 : i32
    %c0_i32_0 = arith.constant 0 : i32
    %c0_i32_1 = arith.constant 0 : i32
    return %c0_i32, %c0_i32_0 : i32, i32
  }
  func.func @transform_3(%arg0: i32, %arg1: memref<32xi32, #tpu.memory_space<smem>>) -> (i32, i32) {
    %c0_i32 = arith.constant 0 : i32
    %c0_i32_0 = arith.constant 0 : i32
    return %arg0, %c0_i32 : i32, i32
  }
}

</mosaic_0001>

<llo_original>
// kernel: tpu_custom_call.1
$region0: #{tpu_custom_call.1}
  #allocation0 [shape = 'u32[]', space=smem, size = 0x4, offset = 0x4, fixed_abs, tag = 'smem constant byte address 0x4 - core index']
  #allocation1 [shape = 'u32[72,128]{1,0:T(1,128)}', space=vmem, size = 0x9000, scoped, tag = 'internal scratch']
  #allocation2 [shape = 'f32[8,16]{1,0:T(8,128)}', space=vmem, size = 0x1000, scoped, tag = 'scratch operand']
  #allocation3 [shape = 's32[1]{0}', space=sflag, size = 0x4, scoped, tag = 'scratch operand']
  #allocation4 [shape = 's32[1]{0}', space=sflag, size = 0x4, scoped, tag = 'scoped memory for tpu_custom_call.1']
  #allocation5 [shape = 'u8[512]{0}', space=smem, size = 0x200, scoped, tag = 'prefetched SMEM operand 0']
  #allocation8 [shape = 's32[]', space=sflag, size = 0x4, offset = 0, fixed_abs, tag = 'sflag constant byte address 0x0 - dummy sync flag']
  #allocation9 [shape = 's32[]', space=sflag, size = 0x4, offset = 0, fixed_abs, tag = 'sflag constant byte address 0x0 - dummy sync flag']
  #allocation10 [shape = 's32[]', space=sflag, size = 0x4, offset = 0, fixed_abs, tag = 'sflag constant byte address 0x0 - dummy sync flag']
  #allocation11 [shape = 's32[]', space=sflag, size = 0x4, offset = 0, fixed_abs, tag = 'sflag constant byte address 0x0 - dummy sync flag']
  #allocation12 [shape = 's32[]', space=sflag, size = 0x4, offset = 0, fixed_abs, tag = 'sflag constant byte address 0x0 - dummy sync flag']
  #allocation13 [shape = 's32[]', space=sflag, size = 0x4, offset = 0, fixed_abs, tag = 'sflag constant byte address 0x0 - dummy sync flag']
  #allocation14 [shape = 's32[]', space=sflag, size = 0x4, offset = 0, fixed_abs, tag = 'sflag constant byte address 0x0 - dummy sync flag']
  #allocation15 [shape = 's32[]', space=sflag, size = 0x4, offset = 0, fixed_abs, tag = 'sflag constant byte address 0x0 - dummy sync flag']
  %s0 = inlined_call_operand.vmem [shape: s32[32], index: 0, kind: input, shape index: {}]
  %s1 = inlined_call_operand.vmem [shape: f32[64,16], index: 1, kind: input, shape index: {}]
  %s2 = inlined_call_operand.vmem [shape: f32[128,16], index: 2, kind: input, shape index: {}]
  %s3 = inlined_call_operand.vmem [shape: f32[1,128], index: 3, kind: input, shape index: {}]
  %s4 = inlined_call_operand.hbm [shape: f32[32,128], index: 4, kind: output, shape index: {}]
  %s5 = sld [smem:[#allocation0]]
  $region281: #{tpu_custom_call.1} parent=0
    _
  %s7 = ssub.s32 1, %s5
  %s8 = scalar_select 0, %s7, %s5
  %s10 = sshll.u32 %s0, 4
  %s11 = int_to_ptr.vmem [resolvable:$true] %s10
  %13 = dma.vmem_to_smem %s11, 16, [#allocation5], [#allocation4]
  %15 = dma.done [#allocation4], 16
  %16 = sfence
  $region1: #{tpu_custom_call.1} parent=0
    #allocation6 [shape = 'u8[8192]{0}', space=vmem, size = 0x2000, scoped, tag = 'output window, operand 0']
    #allocation7 [shape = 's32[2]{0}', space=sflag, size = 0x8, scoped, tag = 'scoped memory for tpu_custom_call.1']
    %17 = vsyncpa [#allocation7], 0
    %s18 = scalar_lea.sflag [#allocation7], 1
    %19 = vsyncpa %s18, 0
    loop: start=0, step=1, limit=6
    $region2: #{tpu_custom_call.1} parent=1 // loop_pre_header
      _
    $region3: #{tpu_custom_call.1} parent=1 // loop_header
      %s21 = sphi 0, %s25
      %p22 = scmp.ge.s32.totalorder %s21, 6
      %s29 = sphi 0, %s29
      %s31 = sphi 0, %s29
      %s32 = sphi 0, %s31
      %s46 = sphi 0, %s32
      %s50 = sphi 0, %s50
      %s52 = sphi 0, %s50
      %s53 = sphi 0, %s52
      %s67 = sphi 0, %s53
      %s73 = sphi 0, %s75
      %s76 = sphi 0, %s73
      %s77 = sphi 0, %s76
      %s93 = sphi 0, %s77
    $region4: #{tpu_custom_call.1} parent=1 // loop_header_branch
      %24 = sbr.rel (%p22) target = $region8
    $region5: #{tpu_custom_call.1} parent=1 // loop_body
      %s26 = ssub.s32 %s21, 1
      %s27 = ssub.s32 %s21, 2
      %s28 = sadd.s32 %s21, 1
      %s30 = sadd.s32 %s29, 1
      %p33 = scmp.eq.s32.totalorder %s21, 3
      %p34 = scmp.ne.s32.totalorder %s29, %s31
      %p35 = scmp.eq.s32.totalorder %s21, 0
      %p36 = por %p34, %p35
      %p37 = scmp.ne.s32.totalorder %s29, %s31
      %p38 = scmp.eq.s32.totalorder %s26, 3
      %p39 = por %p37, %p38
      %p40 = scmp.ne.s32.totalorder %s31, %s32
      %p41 = scmp.eq.s32.totalorder %s26, 0
      %p42 = por %p40, %p41
      %p43 = scmp.ne.s32.totalorder %s31, %s32
      %p44 = scmp.eq.s32.totalorder %s27, 3
      %p45 = por %p43, %p44
      %p47 = scmp.ne.s32.totalorder %s32, %s46
      %p48 = scmp.eq.s32.totalorder %s27, 0
      %p49 = por %p47, %p48
      %s51 = sadd.s32 %s50, 1
      %p54 = scmp.eq.s32.totalorder %s21, 3
      %p55 = scmp.ne.s32.totalorder %s50, %s52
      %p56 = scmp.eq.s32.totalorder %s21, 0
      %p57 = por %p55, %p56
      %p58 = scmp.ne.s32.totalorder %s50, %s52
      %p59 = scmp.eq.s32.totalorder %s26, 3
      %p60 = por %p58, %p59
      %p61 = scmp.ne.s32.totalorder %s52, %s53
      %p62 = scmp.eq.s32.totalorder %s26, 0
      %p63 = por %p61, %p62
      %p64 = scmp.ne.s32.totalorder %s52, %s53
      %p65 = scmp.eq.s32.totalorder %s27, 3
      %p66 = por %p64, %p65
      %p68 = scmp.ne.s32.totalorder %s53, %s67
      %p69 = scmp.eq.s32.totalorder %s27, 0
      %p70 = por %p68, %p69
      %s71 = ssub.s32 %s21, %s28
      %p72 = scmp.eq.s32.totalorder %s71, 0
      %s74 = sadd.s32 %s73, 1
      %s75 = scalar_select %p72, %s73, %s74
      %p78 = pneg %p72
      %p79 = scmp.eq.s32.totalorder %s21, 3
      %p80 = por %p78, %p79
      %p81 = scmp.ne.s32.totalorder %s73, %s76
      %p82 = scmp.eq.s32.totalorder %s21, 0
      %p83 = por %p81, %p82
      %p84 = scmp.ne.s32.totalorder %s73, %s76
      %p85 = scmp.eq.s32.totalorder %s26, 3
      %p86 = por %p84, %p85
      %p87 = scmp.ne.s32.totalorder %s76, %s77
      %p88 = scmp.eq.s32.totalorder %s26, 0
      %p89 = por %p87, %p88
      %p90 = scmp.ne.s32.totalorder %s76, %s77
      %p91 = scmp.eq.s32.totalorder %s27, 3
      %p92 = por %p90, %p91
      %p94 = scmp.ne.s32.totalorder %s77, %s93
      %p95 = scmp.eq.s32.totalorder %s27, 0
      %p96 = por %p94, %p95
      %p97 = scmp.le.s32.totalorder 1, %s21
      %p98 = scmp.lt.s32.totalorder %s21, 5
      %p99 = pnand %p97, %p98
      %p100 = pneg %p99
      // Predicated region
      $region9: #{tpu_custom_call.1} parent=5 // pred_check
        _
      $region10: #{tpu_custom_call.1} parent=5 // pred_check_branch
        %102 = sbr.rel (%p99) target = $region12
      $region11: #{tpu_custom_call.1} parent=5 // pred_region
        %s103 = ssub.s32 %s21, 1
        // Predicated region
        $region13: #{tpu_custom_call.1} parent=11 // pred_check
          %p104 = pneg %p42
        $region14: #{tpu_custom_call.1} parent=11 // pred_check_branch
          %106 = sbr.rel (%p104) target = $region16
        $region15: #{tpu_custom_call.1} parent=11 // pred_region
          _
        $region16: #{tpu_custom_call.1} parent=11 // pred_fallthru
          _
        // Predicated region
        $region17: #{tpu_custom_call.1} parent=11 // pred_check
          %p107 = pneg %p63
        $region18: #{tpu_custom_call.1} parent=11 // pred_check_branch
          %109 = sbr.rel (%p107) target = $region20
        $region19: #{tpu_custom_call.1} parent=11 // pred_region
          _
        $region20: #{tpu_custom_call.1} parent=11 // pred_fallthru
          _
      $region12: #{tpu_custom_call.1} parent=5 // pred_fallthru
        _
      %p110 = scmp.lt.s32.totalorder %s21, 4
      // Predicated region
      $region21: #{tpu_custom_call.1} parent=5 // pred_check
        %p111 = pneg %p110
      $region22: #{tpu_custom_call.1} parent=5 // pred_check_branch
        %113 = sbr.rel (%p111) target = $region24
      $region23: #{tpu_custom_call.1} parent=5 // pred_region
        _
      $region24: #{tpu_custom_call.1} parent=5 // pred_fallthru
        _
      %p114 = scmp.le.s32.totalorder 1, %s21
      %p115 = scmp.lt.s32.totalorder %s21, 5
      %p116 = pnand %p114, %p115
      %p117 = pneg %p116
      // Predicated region
      $region25: #{tpu_custom_call.1} parent=5 // pred_check
        _
      $region26: #{tpu_custom_call.1} parent=5 // pred_check_branch
        %119 = sbr.rel (%p116) target = $region28
      $region27: #{tpu_custom_call.1} parent=5 // pred_region
        %s120 = ssub.s32 %s21, 1
        %p121 = pneg %p42
        %p122 = pneg %p39
        %p123 = pneg %p63
        %p124 = pneg %p60
        %p125 = pneg %p89
        %p126 = pneg %p86
        %s127 = sand.u32 %s76, 1
        %s128 = scalar_lea.sflag [#allocation7], %s127
        %s129 = sand.u32 %s76, 1
        %s130 = smul.addr %s129, 8
        %s131 = scalar_lea.vmem [#allocation6], %s130
        %s132 = smul.u32 %s26, 8
        %s133 = sld [smem:[#allocation5 + %s132]]
        %s134 = scalar_lea.vmem %s1, %s133
        // Predicated region
        $region29: #{tpu_custom_call.1} parent=27 // pred_check
          _
        $region30: #{tpu_custom_call.1} parent=27 // pred_check_branch
          %136 = sbr.rel target = $region32
        $region31: #{tpu_custom_call.1} parent=27 // pred_region
          // Predicated region
          $region44: #{tpu_custom_call.1} parent=31 // pred_check
            _
          $region45: #{tpu_custom_call.1} parent=31 // pred_check_branch
            %152 = sbr.rel (0) target = $region47
          $region46: #{tpu_custom_call.1} parent=31 // pred_region
            %s154 = ssub.s32 2, 1
            loop: start=0, step=1, limit=1
            $region48: #{tpu_custom_call.1} parent=46 // loop_pre_header
              _
            $region49: #{tpu_custom_call.1} parent=46 // loop_header
              %s156 = sphi 0, %s160
              %p157 = scmp.ge.s32.totalorder %s156, 1
              %s161 = sphi %s134, %s134
              %s162 = sphi [#allocation2], [#allocation2]
            $region50: #{tpu_custom_call.1} parent=46 // loop_header_branch
              %159 = sbr.rel (%p157) target = $region54
            $region51: #{tpu_custom_call.1} parent=46 // loop_body
              %v163 = vld [vmem:[%s161] sm:%s154]
              %164 = vst [vmem:[%s162] sm:%s154] %v163
            $region52: #{tpu_custom_call.1} parent=46 // loop_footer
              %s160 = sadd.s32 1, %s156
            $region53: #{tpu_custom_call.1} parent=46 // loop_footer_branch
              %155 = sbr.rel target = $region49
            $region54: #{tpu_custom_call.1} parent=46 // loop_exit
              _
          $region47: #{tpu_custom_call.1} parent=31 // pred_fallthru
            _
        $region32: #{tpu_custom_call.1} parent=27 // pred_fallthru
          _
        // Predicated region
        $region33: #{tpu_custom_call.1} parent=27 // pred_check
          _
        $region34: #{tpu_custom_call.1} parent=27 // pred_check_branch
          %138 = sbr.rel (0) target = $region36
        $region35: #{tpu_custom_call.1} parent=27 // pred_region
          %s140 = ssub.s32 2, 1
          loop: start=0, step=1, limit=1
          $region37: #{tpu_custom_call.1} parent=35 // loop_pre_header
            _
          $region38: #{tpu_custom_call.1} parent=35 // loop_header
            %s142 = sphi 0, %s146
            %p143 = scmp.ge.s32.totalorder %s142, 1
            %s147 = sphi %s134, %s134
            %s148 = sphi [#allocation2], [#allocation2]
          $region39: #{tpu_custom_call.1} parent=35 // loop_header_branch
            %145 = sbr.rel (%p143) target = $region43
          $region40: #{tpu_custom_call.1} parent=35 // loop_body
            %v149 = vld [vmem:[%s147] sm:%s140]
            %150 = vst [vmem:[%s148] sm:%s140] %v149
          $region41: #{tpu_custom_call.1} parent=35 // loop_footer
            %s146 = sadd.s32 1, %s142
          $region42: #{tpu_custom_call.1} parent=35 // loop_footer_branch
            %141 = sbr.rel target = $region38
          $region43: #{tpu_custom_call.1} parent=35 // loop_exit
            _
        $region36: #{tpu_custom_call.1} parent=27 // pred_fallthru
          _
        // Predicated region
        $region55: #{tpu_custom_call.1} parent=27 // pred_check
          _
        $region56: #{tpu_custom_call.1} parent=27 // pred_check_branch
          %167 = sbr.rel (0) target = $region58
        $region57: #{tpu_custom_call.1} parent=27 // pred_region
          %168 = vsyncadd [#allocation3], 16
        $region58: #{tpu_custom_call.1} parent=27 // pred_fallthru
          _
        %s169 = sadd.s32 %s132, 1
        %s170 = sld [smem:[#allocation5 + %s169]]
        %s171 = scalar_lea.vmem %s1, %s170
        %s172 = scalar_lea.vmem [#allocation2], 1
        // Predicated region
        $region59: #{tpu_custom_call.1} parent=27 // pred_check
          _
        $region60: #{tpu_custom_call.1} parent=27 // pred_check_branch
          %174 = sbr.rel target = $region62
        $region61: #{tpu_custom_call.1} parent=27 // pred_region
          // Predicated region
          $region74: #{tpu_custom_call.1} parent=61 // pred_check
            _
          $region75: #{tpu_custom_call.1} parent=61 // pred_check_branch
            %190 = sbr.rel (0) target = $region77
          $region76: #{tpu_custom_call.1} parent=61 // pred_region
            %s192 = ssub.s32 2, 1
            loop: start=0, step=1, limit=1
            $region78: #{tpu_custom_call.1} parent=76 // loop_pre_header
              _
            $region79: #{tpu_custom_call.1} parent=76 // loop_header
              %s194 = sphi 0, %s198
              %p195 = scmp.ge.s32.totalorder %s194, 1
              %s199 = sphi %s171, %s171
              %s200 = sphi %s172, %s172
            $region80: #{tpu_custom_call.1} parent=76 // loop_header_branch
              %197 = sbr.rel (%p195) target = $region84
            $region81: #{tpu_custom_call.1} parent=76 // loop_body
              %v201 = vld [vmem:[%s199] sm:%s192]
              %202 = vst [vmem:[%s200] sm:%s192] %v201
            $region82: #{tpu_custom_call.1} parent=76 // loop_footer
              %s198 = sadd.s32 1, %s194
            $region83: #{tpu_custom_call.1} parent=76 // loop_footer_branch
              %193 = sbr.rel target = $region79
            $region84: #{tpu_custom_call.1} parent=76 // loop_exit
              _
          $region77: #{tpu_custom_call.1} parent=61 // pred_fallthru
            _
        $region62: #{tpu_custom_call.1} parent=27 // pred_fallthru
          _
        // Predicated region
        $region63: #{tpu_custom_call.1} parent=27 // pred_check
          _
        $region64: #{tpu_custom_call.1} parent=27 // pred_check_branch
          %176 = sbr.rel (0) target = $region66
        $region65: #{tpu_custom_call.1} parent=27 // pred_region
          %s178 = ssub.s32 2, 1
          loop: start=0, step=1, limit=1
          $region67: #{tpu_custom_call.1} parent=65 // loop_pre_header
            _
          $region68: #{tpu_custom_call.1} parent=65 // loop_header
            %s180 = sphi 0, %s184
            %p181 = scmp.ge.s32.totalorder %s180, 1
            %s185 = sphi %s171, %s171
            %s186 = sphi %s172, %s172
          $region69: #{tpu_custom_call.1} parent=65 // loop_header_branch
            %183 = sbr.rel (%p181) target = $region73
          $region70: #{tpu_custom_call.1} parent=65 // loop_body
            %v187 = vld [vmem:[%s185] sm:%s178]
            %188 = vst [vmem:[%s186] sm:%s178] %v187
          $region71: #{tpu_custom_call.1} parent=65 // loop_footer
            %s184 = sadd.s32 1, %s180
          $region72: #{tpu_custom_call.1} parent=65 // loop_footer_branch
            %179 = sbr.rel target = $region68
          $region73: #{tpu_custom_call.1} parent=65 // loop_exit
            _
        $region66: #{tpu_custom_call.1} parent=27 // pred_fallthru
          _
        // Predicated region
        $region85: #{tpu_custom_call.1} parent=27 // pred_check
          _
        $region86: #{tpu_custom_call.1} parent=27 // pred_check_branch
          %205 = sbr.rel (0) target = $region88
        $region87: #{tpu_custom_call.1} parent=27 // pred_region
          %206 = vsyncadd [#allocation3], 16
        $region88: #{tpu_custom_call.1} parent=27 // pred_fallthru
          _
        %s207 = sadd.s32 %s132, 2
        %s208 = sld [smem:[#allocation5 + %s207]]
        %s209 = scalar_lea.vmem %s1, %s208
        %s210 = scalar_lea.vmem [#allocation2], 2
        // Predicated region
        $region89: #{tpu_custom_call.1} parent=27 // pred_check
          _
        $region90: #{tpu_custom_call.1} parent=27 // pred_check_branch
          %212 = sbr.rel target = $region92
        $region91: #{tpu_custom_call.1} parent=27 // pred_region
          // Predicated region
          $region104: #{tpu_custom_call.1} parent=91 // pred_check
            _
          $region105: #{tpu_custom_call.1} parent=91 // pred_check_branch
            %228 = sbr.rel (0) target = $region107
          $region106: #{tpu_custom_call.1} parent=91 // pred_region
            %s230 = ssub.s32 2, 1
            loop: start=0, step=1, limit=1
            $region108: #{tpu_custom_call.1} parent=106 // loop_pre_header
              _
            $region109: #{tpu_custom_call.1} parent=106 // loop_header
              %s232 = sphi 0, %s236
              %p233 = scmp.ge.s32.totalorder %s232, 1
              %s237 = sphi %s209, %s209
              %s238 = sphi %s210, %s210
            $region110: #{tpu_custom_call.1} parent=106 // loop_header_branch
              %235 = sbr.rel (%p233) target = $region114
            $region111: #{tpu_custom_call.1} parent=106 // loop_body
              %v239 = vld [vmem:[%s237] sm:%s230]
              %240 = vst [vmem:[%s238] sm:%s230] %v239
            $region112: #{tpu_custom_call.1} parent=106 // loop_footer
              %s236 = sadd.s32 1, %s232
            $region113: #{tpu_custom_call.1} parent=106 // loop_footer_branch
              %231 = sbr.rel target = $region109
            $region114: #{tpu_custom_call.1} parent=106 // loop_exit
              _
          $region107: #{tpu_custom_call.1} parent=91 // pred_fallthru
            _
        $region92: #{tpu_custom_call.1} parent=27 // pred_fallthru
          _
        // Predicated region
        $region93: #{tpu_custom_call.1} parent=27 // pred_check
          _
        $region94: #{tpu_custom_call.1} parent=27 // pred_check_branch
          %214 = sbr.rel (0) target = $region96
        $region95: #{tpu_custom_call.1} parent=27 // pred_region
          %s216 = ssub.s32 2, 1
          loop: start=0, step=1, limit=1
          $region97: #{tpu_custom_call.1} parent=95 // loop_pre_header
            _
          $region98: #{tpu_custom_call.1} parent=95 // loop_header
            %s218 = sphi 0, %s222
            %p219 = scmp.ge.s32.totalorder %s218, 1
            %s223 = sphi %s209, %s209
            %s224 = sphi %s210, %s210
          $region99: #{tpu_custom_call.1} parent=95 // loop_header_branch
            %221 = sbr.rel (%p219) target = $region103
          $region100: #{tpu_custom_call.1} parent=95 // loop_body
            %v225 = vld [vmem:[%s223] sm:%s216]
            %226 = vst [vmem:[%s224] sm:%s216] %v225
          $region101: #{tpu_custom_call.1} parent=95 // loop_footer
            %s222 = sadd.s32 1, %s218
          $region102: #{tpu_custom_call.1} parent=95 // loop_footer_branch
            %217 = sbr.rel target = $region98
          $region103: #{tpu_custom_call.1} parent=95 // loop_exit
            _
        $region96: #{tpu_custom_call.1} parent=27 // pred_fallthru
          _
        // Predicated region
        $region115: #{tpu_custom_call.1} parent=27 // pred_check
          _
        $region116: #{tpu_custom_call.1} parent=27 // pred_check_branch
          %243 = sbr.rel (0) target = $region118
        $region117: #{tpu_custom_call.1} parent=27 // pred_region
          %244 = vsyncadd [#allocation3], 16
        $region118: #{tpu_custom_call.1} parent=27 // pred_fallthru
          _
        %s245 = sadd.s32 %s132, 3
        %s246 = sld [smem:[#allocation5 + %s245]]
        %s247 = scalar_lea.vmem %s1, %s246
        %s248 = scalar_lea.vmem [#allocation2], 3
        // Predicated region
        $region119: #{tpu_custom_call.1} parent=27 // pred_check
          _
        $region120: #{tpu_custom_call.1} parent=27 // pred_check_branch
          %250 = sbr.rel target = $region122
        $region121: #{tpu_custom_call.1} parent=27 // pred_region
          // Predicated region
          $region134: #{tpu_custom_call.1} parent=121 // pred_check
            _
          $region135: #{tpu_custom_call.1} parent=121 // pred_check_branch
            %266 = sbr.rel (0) target = $region137
          $region136: #{tpu_custom_call.1} parent=121 // pred_region
            %s268 = ssub.s32 2, 1
            loop: start=0, step=1, limit=1
            $region138: #{tpu_custom_call.1} parent=136 // loop_pre_header
              _
            $region139: #{tpu_custom_call.1} parent=136 // loop_header
              %s270 = sphi 0, %s274
              %p271 = scmp.ge.s32.totalorder %s270, 1
              %s275 = sphi %s247, %s247
              %s276 = sphi %s248, %s248
            $region140: #{tpu_custom_call.1} parent=136 // loop_header_branch
              %273 = sbr.rel (%p271) target = $region144
            $region141: #{tpu_custom_call.1} parent=136 // loop_body
              %v277 = vld [vmem:[%s275] sm:%s268]
              %278 = vst [vmem:[%s276] sm:%s268] %v277
            $region142: #{tpu_custom_call.1} parent=136 // loop_footer
              %s274 = sadd.s32 1, %s270
            $region143: #{tpu_custom_call.1} parent=136 // loop_footer_branch
              %269 = sbr.rel target = $region139
            $region144: #{tpu_custom_call.1} parent=136 // loop_exit
              _
          $region137: #{tpu_custom_call.1} parent=121 // pred_fallthru
            _
        $region122: #{tpu_custom_call.1} parent=27 // pred_fallthru
          _
        // Predicated region
        $region123: #{tpu_custom_call.1} parent=27 // pred_check
          _
        $region124: #{tpu_custom_call.1} parent=27 // pred_check_branch
          %252 = sbr.rel (0) target = $region126
        $region125: #{tpu_custom_call.1} parent=27 // pred_region
          %s254 = ssub.s32 2, 1
          loop: start=0, step=1, limit=1
          $region127: #{tpu_custom_call.1} parent=125 // loop_pre_header
            _
          $region128: #{tpu_custom_call.1} parent=125 // loop_header
            %s256 = sphi 0, %s260
            %p257 = scmp.ge.s32.totalorder %s256, 1
            %s261 = sphi %s247, %s247
            %s262 = sphi %s248, %s248
          $region129: #{tpu_custom_call.1} parent=125 // loop_header_branch
            %259 = sbr.rel (%p257) target = $region133
          $region130: #{tpu_custom_call.1} parent=125 // loop_body
            %v263 = vld [vmem:[%s261] sm:%s254]
            %264 = vst [vmem:[%s262] sm:%s254] %v263
          $region131: #{tpu_custom_call.1} parent=125 // loop_footer
            %s260 = sadd.s32 1, %s256
          $region132: #{tpu_custom_call.1} parent=125 // loop_footer_branch
            %255 = sbr.rel target = $region128
          $region133: #{tpu_custom_call.1} parent=125 // loop_exit
            _
        $region126: #{tpu_custom_call.1} parent=27 // pred_fallthru
          _
        // Predicated region
        $region145: #{tpu_custom_call.1} parent=27 // pred_check
          _
        $region146: #{tpu_custom_call.1} parent=27 // pred_check_branch
          %281 = sbr.rel (0) target = $region148
        $region147: #{tpu_custom_call.1} parent=27 // pred_region
          %282 = vsyncadd [#allocation3], 16
        $region148: #{tpu_custom_call.1} parent=27 // pred_fallthru
          _
        %s283 = sadd.s32 %s132, 4
        %s284 = sld [smem:[#allocation5 + %s283]]
        %s285 = scalar_lea.vmem %s1, %s284
        %s286 = scalar_lea.vmem [#allocation2], 4
        // Predicated region
        $region149: #{tpu_custom_call.1} parent=27 // pred_check
          _
        $region150: #{tpu_custom_call.1} parent=27 // pred_check_branch
          %288 = sbr.rel target = $region152
        $region151: #{tpu_custom_call.1} parent=27 // pred_region
          // Predicated region
          $region164: #{tpu_custom_call.1} parent=151 // pred_check
            _
          $region165: #{tpu_custom_call.1} parent=151 // pred_check_branch
            %304 = sbr.rel (0) target = $region167
          $region166: #{tpu_custom_call.1} parent=151 // pred_region
            %s306 = ssub.s32 2, 1
            loop: start=0, step=1, limit=1
            $region168: #{tpu_custom_call.1} parent=166 // loop_pre_header
              _
            $region169: #{tpu_custom_call.1} parent=166 // loop_header
              %s308 = sphi 0, %s312
              %p309 = scmp.ge.s32.totalorder %s308, 1
              %s313 = sphi %s285, %s285
              %s314 = sphi %s286, %s286
            $region170: #{tpu_custom_call.1} parent=166 // loop_header_branch
              %311 = sbr.rel (%p309) target = $region174
            $region171: #{tpu_custom_call.1} parent=166 // loop_body
              %v315 = vld [vmem:[%s313] sm:%s306]
              %316 = vst [vmem:[%s314] sm:%s306] %v315
            $region172: #{tpu_custom_call.1} parent=166 // loop_footer
              %s312 = sadd.s32 1, %s308
            $region173: #{tpu_custom_call.1} parent=166 // loop_footer_branch
              %307 = sbr.rel target = $region169
            $region174: #{tpu_custom_call.1} parent=166 // loop_exit
              _
          $region167: #{tpu_custom_call.1} parent=151 // pred_fallthru
            _
        $region152: #{tpu_custom_call.1} parent=27 // pred_fallthru
          _
        // Predicated region
        $region153: #{tpu_custom_call.1} parent=27 // pred_check
          _
        $region154: #{tpu_custom_call.1} parent=27 // pred_check_branch
          %290 = sbr.rel (0) target = $region156
        $region155: #{tpu_custom_call.1} parent=27 // pred_region
          %s292 = ssub.s32 2, 1
          loop: start=0, step=1, limit=1
          $region157: #{tpu_custom_call.1} parent=155 // loop_pre_header
            _
          $region158: #{tpu_custom_call.1} parent=155 // loop_header
            %s294 = sphi 0, %s298
            %p295 = scmp.ge.s32.totalorder %s294, 1
            %s299 = sphi %s285, %s285
            %s300 = sphi %s286, %s286
          $region159: #{tpu_custom_call.1} parent=155 // loop_header_branch
            %297 = sbr.rel (%p295) target = $region163
          $region160: #{tpu_custom_call.1} parent=155 // loop_body
            %v301 = vld [vmem:[%s299] sm:%s292]
            %302 = vst [vmem:[%s300] sm:%s292] %v301
          $region161: #{tpu_custom_call.1} parent=155 // loop_footer
            %s298 = sadd.s32 1, %s294
          $region162: #{tpu_custom_call.1} parent=155 // loop_footer_branch
            %293 = sbr.rel target = $region158
          $region163: #{tpu_custom_call.1} parent=155 // loop_exit
            _
        $region156: #{tpu_custom_call.1} parent=27 // pred_fallthru
          _
        // Predicated region
        $region175: #{tpu_custom_call.1} parent=27 // pred_check
          _
        $region176: #{tpu_custom_call.1} parent=27 // pred_check_branch
          %319 = sbr.rel (0) target = $region178
        $region177: #{tpu_custom_call.1} parent=27 // pred_region
          %320 = vsyncadd [#allocation3], 16
        $region178: #{tpu_custom_call.1} parent=27 // pred_fallthru
          _
        %s321 = sadd.s32 %s132, 5
        %s322 = sld [smem:[#allocation5 + %s321]]
        %s323 = scalar_lea.vmem %s1, %s322
        %s324 = scalar_lea.vmem [#allocation2], 5
        // Predicated region
        $region179: #{tpu_custom_call.1} parent=27 // pred_check
          _
        $region180: #{tpu_custom_call.1} parent=27 // pred_check_branch
          %326 = sbr.rel target = $region182
        $region181: #{tpu_custom_call.1} parent=27 // pred_region
          // Predicated region
          $region194: #{tpu_custom_call.1} parent=181 // pred_check
            _
          $region195: #{tpu_custom_call.1} parent=181 // pred_check_branch
            %342 = sbr.rel (0) target = $region197
          $region196: #{tpu_custom_call.1} parent=181 // pred_region
            %s344 = ssub.s32 2, 1
            loop: start=0, step=1, limit=1
            $region198: #{tpu_custom_call.1} parent=196 // loop_pre_header
              _
            $region199: #{tpu_custom_call.1} parent=196 // loop_header
              %s346 = sphi 0, %s350
              %p347 = scmp.ge.s32.totalorder %s346, 1
              %s351 = sphi %s323, %s323
              %s352 = sphi %s324, %s324
            $region200: #{tpu_custom_call.1} parent=196 // loop_header_branch
              %349 = sbr.rel (%p347) target = $region204
            $region201: #{tpu_custom_call.1} parent=196 // loop_body
              %v353 = vld [vmem:[%s351] sm:%s344]
              %354 = vst [vmem:[%s352] sm:%s344] %v353
            $region202: #{tpu_custom_call.1} parent=196 // loop_footer
              %s350 = sadd.s32 1, %s346
            $region203: #{tpu_custom_call.1} parent=196 // loop_footer_branch
              %345 = sbr.rel target = $region199
            $region204: #{tpu_custom_call.1} parent=196 // loop_exit
              _
          $region197: #{tpu_custom_call.1} parent=181 // pred_fallthru
            _
        $region182: #{tpu_custom_call.1} parent=27 // pred_fallthru
          _
        // Predicated region
        $region183: #{tpu_custom_call.1} parent=27 // pred_check
          _
        $region184: #{tpu_custom_call.1} parent=27 // pred_check_branch
          %328 = sbr.rel (0) target = $region186
        $region185: #{tpu_custom_call.1} parent=27 // pred_region
          %s330 = ssub.s32 2, 1
          loop: start=0, step=1, limit=1
          $region187: #{tpu_custom_call.1} parent=185 // loop_pre_header
            _
          $region188: #{tpu_custom_call.1} parent=185 // loop_header
            %s332 = sphi 0, %s336
            %p333 = scmp.ge.s32.totalorder %s332, 1
            %s337 = sphi %s323, %s323
            %s338 = sphi %s324, %s324
          $region189: #{tpu_custom_call.1} parent=185 // loop_header_branch
            %335 = sbr.rel (%p333) target = $region193
          $region190: #{tpu_custom_call.1} parent=185 // loop_body
            %v339 = vld [vmem:[%s337] sm:%s330]
            %340 = vst [vmem:[%s338] sm:%s330] %v339
          $region191: #{tpu_custom_call.1} parent=185 // loop_footer
            %s336 = sadd.s32 1, %s332
          $region192: #{tpu_custom_call.1} parent=185 // loop_footer_branch
            %331 = sbr.rel target = $region188
          $region193: #{tpu_custom_call.1} parent=185 // loop_exit
            _
        $region186: #{tpu_custom_call.1} parent=27 // pred_fallthru
          _
        // Predicated region
        $region205: #{tpu_custom_call.1} parent=27 // pred_check
          _
        $region206: #{tpu_custom_call.1} parent=27 // pred_check_branch
          %357 = sbr.rel (0) target = $region208
        $region207: #{tpu_custom_call.1} parent=27 // pred_region
          %358 = vsyncadd [#allocation3], 16
        $region208: #{tpu_custom_call.1} parent=27 // pred_fallthru
          _
        %s359 = sadd.s32 %s132, 6
        %s360 = sld [smem:[#allocation5 + %s359]]
        %s361 = scalar_lea.vmem %s1, %s360
        %s362 = scalar_lea.vmem [#allocation2], 6
        // Predicated region
        $region209: #{tpu_custom_call.1} parent=27 // pred_check
          _
        $region210: #{tpu_custom_call.1} parent=27 // pred_check_branch
          %364 = sbr.rel target = $region212
        $region211: #{tpu_custom_call.1} parent=27 // pred_region
          // Predicated region
          $region224: #{tpu_custom_call.1} parent=211 // pred_check
            _
          $region225: #{tpu_custom_call.1} parent=211 // pred_check_branch
            %380 = sbr.rel (0) target = $region227
          $region226: #{tpu_custom_call.1} parent=211 // pred_region
            %s382 = ssub.s32 2, 1
            loop: start=0, step=1, limit=1
            $region228: #{tpu_custom_call.1} parent=226 // loop_pre_header
              _
            $region229: #{tpu_custom_call.1} parent=226 // loop_header
              %s384 = sphi 0, %s388
              %p385 = scmp.ge.s32.totalorder %s384, 1
              %s389 = sphi %s361, %s361
              %s390 = sphi %s362, %s362
            $region230: #{tpu_custom_call.1} parent=226 // loop_header_branch
              %387 = sbr.rel (%p385) target = $region234
            $region231: #{tpu_custom_call.1} parent=226 // loop_body
              %v391 = vld [vmem:[%s389] sm:%s382]
              %392 = vst [vmem:[%s390] sm:%s382] %v391
            $region232: #{tpu_custom_call.1} parent=226 // loop_footer
              %s388 = sadd.s32 1, %s384
            $region233: #{tpu_custom_call.1} parent=226 // loop_footer_branch
              %383 = sbr.rel target = $region229
            $region234: #{tpu_custom_call.1} parent=226 // loop_exit
              _
          $region227: #{tpu_custom_call.1} parent=211 // pred_fallthru
            _
        $region212: #{tpu_custom_call.1} parent=27 // pred_fallthru
          _
        // Predicated region
        $region213: #{tpu_custom_call.1} parent=27 // pred_check
          _
        $region214: #{tpu_custom_call.1} parent=27 // pred_check_branch
          %366 = sbr.rel (0) target = $region216
        $region215: #{tpu_custom_call.1} parent=27 // pred_region
          %s368 = ssub.s32 2, 1
          loop: start=0, step=1, limit=1
          $region217: #{tpu_custom_call.1} parent=215 // loop_pre_header
            _
          $region218: #{tpu_custom_call.1} parent=215 // loop_header
            %s370 = sphi 0, %s374
            %p371 = scmp.ge.s32.totalorder %s370, 1
            %s375 = sphi %s361, %s361
            %s376 = sphi %s362, %s362
          $region219: #{tpu_custom_call.1} parent=215 // loop_header_branch
            %373 = sbr.rel (%p371) target = $region223
          $region220: #{tpu_custom_call.1} parent=215 // loop_body
            %v377 = vld [vmem:[%s375] sm:%s368]
            %378 = vst [vmem:[%s376] sm:%s368] %v377
          $region221: #{tpu_custom_call.1} parent=215 // loop_footer
            %s374 = sadd.s32 1, %s370
          $region222: #{tpu_custom_call.1} parent=215 // loop_footer_branch
            %369 = sbr.rel target = $region218
          $region223: #{tpu_custom_call.1} parent=215 // loop_exit
            _
        $region216: #{tpu_custom_call.1} parent=27 // pred_fallthru
          _
        // Predicated region
        $region235: #{tpu_custom_call.1} parent=27 // pred_check
          _
        $region236: #{tpu_custom_call.1} parent=27 // pred_check_branch
          %395 = sbr.rel (0) target = $region238
        $region237: #{tpu_custom_call.1} parent=27 // pred_region
          %396 = vsyncadd [#allocation3], 16
        $region238: #{tpu_custom_call.1} parent=27 // pred_fallthru
          _
        %s397 = sadd.s32 %s132, 7
        %s398 = sld [smem:[#allocation5 + %s397]]
        %s399 = scalar_lea.vmem %s1, %s398
        %s400 = scalar_lea.vmem [#allocation2], 7
        // Predicated region
        $region239: #{tpu_custom_call.1} parent=27 // pred_check
          _
        $region240: #{tpu_custom_call.1} parent=27 // pred_check_branch
          %402 = sbr.rel target = $region242
        $region241: #{tpu_custom_call.1} parent=27 // pred_region
          // Predicated region
          $region254: #{tpu_custom_call.1} parent=241 // pred_check
            _
          $region255: #{tpu_custom_call.1} parent=241 // pred_check_branch
            %418 = sbr.rel (0) target = $region257
          $region256: #{tpu_custom_call.1} parent=241 // pred_region
            %s420 = ssub.s32 2, 1
            loop: start=0, step=1, limit=1
            $region258: #{tpu_custom_call.1} parent=256 // loop_pre_header
              _
            $region259: #{tpu_custom_call.1} parent=256 // loop_header
              %s422 = sphi 0, %s426
              %p423 = scmp.ge.s32.totalorder %s422, 1
              %s427 = sphi %s399, %s399
              %s428 = sphi %s400, %s400
            $region260: #{tpu_custom_call.1} parent=256 // loop_header_branch
              %425 = sbr.rel (%p423) target = $region264
            $region261: #{tpu_custom_call.1} parent=256 // loop_body
              %v429 = vld [vmem:[%s427] sm:%s420]
              %430 = vst [vmem:[%s428] sm:%s420] %v429
            $region262: #{tpu_custom_call.1} parent=256 // loop_footer
              %s426 = sadd.s32 1, %s422
            $region263: #{tpu_custom_call.1} parent=256 // loop_footer_branch
              %421 = sbr.rel target = $region259
            $region264: #{tpu_custom_call.1} parent=256 // loop_exit
              _
          $region257: #{tpu_custom_call.1} parent=241 // pred_fallthru
            _
        $region242: #{tpu_custom_call.1} parent=27 // pred_fallthru
          _
        // Predicated region
        $region243: #{tpu_custom_call.1} parent=27 // pred_check
          _
        $region244: #{tpu_custom_call.1} parent=27 // pred_check_branch
          %404 = sbr.rel (0) target = $region246
        $region245: #{tpu_custom_call.1} parent=27 // pred_region
          %s406 = ssub.s32 2, 1
          loop: start=0, step=1, limit=1
          $region247: #{tpu_custom_call.1} parent=245 // loop_pre_header
            _
          $region248: #{tpu_custom_call.1} parent=245 // loop_header
            %s408 = sphi 0, %s412
            %p409 = scmp.ge.s32.totalorder %s408, 1
            %s413 = sphi %s399, %s399
            %s414 = sphi %s400, %s400
          $region249: #{tpu_custom_call.1} parent=245 // loop_header_branch
            %411 = sbr.rel (%p409) target = $region253
          $region250: #{tpu_custom_call.1} parent=245 // loop_body
            %v415 = vld [vmem:[%s413] sm:%s406]
            %416 = vst [vmem:[%s414] sm:%s406] %v415
          $region251: #{tpu_custom_call.1} parent=245 // loop_footer
            %s412 = sadd.s32 1, %s408
          $region252: #{tpu_custom_call.1} parent=245 // loop_footer_branch
            %407 = sbr.rel target = $region248
          $region253: #{tpu_custom_call.1} parent=245 // loop_exit
            _
        $region246: #{tpu_custom_call.1} parent=27 // pred_fallthru
          _
        // Predicated region
        $region265: #{tpu_custom_call.1} parent=27 // pred_check
          _
        $region266: #{tpu_custom_call.1} parent=27 // pred_check_branch
          %433 = sbr.rel (0) target = $region268
        $region267: #{tpu_custom_call.1} parent=27 // pred_region
          %434 = vsyncadd [#allocation3], 16
        $region268: #{tpu_custom_call.1} parent=27 // pred_fallthru
          _
        %s435 = smul.u32 1, 1
        %s436 = sshll.u32 %s435, 4
        %437 = dma.done [#allocation3], %s436
        %s438 = sshll.u32 %s435, 4
        %439 = dma.done [#allocation3], %s438
        %s440 = sshll.u32 %s435, 4
        %441 = dma.done [#allocation3], %s440
        %s442 = sshll.u32 %s435, 4
        %443 = dma.done [#allocation3], %s442
        %s444 = sshll.u32 %s435, 4
        %445 = dma.done [#allocation3], %s444
        %s446 = sshll.u32 %s435, 4
        %447 = dma.done [#allocation3], %s446
        %s448 = sshll.u32 %s435, 4
        %449 = dma.done [#allocation3], %s448
        %s450 = sshll.u32 %s435, 4
        %451 = dma.done [#allocation3], %s450
        %v452 = vld [vmem:[#allocation2] sm:$0xff]
        %v453 = vld [vmem:[%s2] sm:$0xff]
        %v454 = vld [vmem:[%s2 + $0x8] sm:$0xff]
        %v455 = vld [vmem:[%s2 + $0x10] sm:$0xff]
        %v456 = vld [vmem:[%s2 + $0x18] sm:$0xff]
        %v457 = vld [vmem:[%s2 + $0x20] sm:$0xff]
        %v458 = vld [vmem:[%s2 + $0x28] sm:$0xff]
        %v459 = vld [vmem:[%s2 + $0x30] sm:$0xff]
        %v460 = vld [vmem:[%s2 + $0x38] sm:$0xff]
        %v461 = vld [vmem:[%s2 + $0x40] sm:$0xff]
        %v462 = vld [vmem:[%s2 + $0x48] sm:$0xff]
        %v463 = vld [vmem:[%s2 + $0x50] sm:$0xff]
        %v464 = vld [vmem:[%s2 + $0x58] sm:$0xff]
        %v465 = vld [vmem:[%s2 + $0x60] sm:$0xff]
        %v466 = vld [vmem:[%s2 + $0x68] sm:$0xff]
        %v467 = vld [vmem:[%s2 + $0x70] sm:$0xff]
        %v468 = vld [vmem:[%s2 + $0x78] sm:$0xff]
        %v469 = vld [vmem:[%s3] sm:$0x1]
        %v471 = vperm.slane %v469, 0
        %vm473 = vcmask 130048
        %v475 = vsel %vm473, %v452, 0
        %v478 = vsel %vm473, %v453, 0
        %v481 = vsel %vm473, %v454, 0
        %v484 = vsel %vm473, %v455, 0
        %v487 = vsel %vm473, %v456, 0
        %v490 = vsel %vm473, %v457, 0
        %v493 = vsel %vm473, %v458, 0
        %v496 = vsel %vm473, %v459, 0
        %v499 = vsel %vm473, %v460, 0
        %v502 = vsel %vm473, %v461, 0
        %v505 = vsel %vm473, %v462, 0
        %v508 = vsel %vm473, %v463, 0
        %v511 = vsel %vm473, %v464, 0
        %v514 = vsel %vm473, %v465, 0
        %v517 = vsel %vm473, %v466, 0
        %v520 = vsel %vm473, %v467, 0
        %v523 = vsel %vm473, %v468, 0
        %525 = vmatpush.xpose.msra.mxu0 %v523
        %526 = vmatpush.xpose.msra.mxu0 %v520
        %527 = vmatpush.xpose.msra.mxu0 %v517
        %528 = vmatpush.xpose.msra.mxu0 %v514
        %529 = vmatpush.xpose.msra.mxu0 %v511
        %530 = vmatpush.xpose.msra.mxu0 %v508
        %531 = vmatpush.xpose.msra.mxu0 %v505
        %532 = vmatpush.xpose.msra.mxu0 %v502
        %533 = vmatpush.xpose.msra.mxu0 %v499
        %534 = vmatpush.xpose.msra.mxu0 %v496
        %535 = vmatpush.xpose.msra.mxu0 %v493
        %536 = vmatpush.xpose.msra.mxu0 %v490
        %537 = vmatpush.xpose.msra.mxu0 %v487
        %538 = vmatpush.xpose.msra.mxu0 %v484
        %539 = vmatpush.xpose.msra.mxu0 %v481
        %540 = vmatpush.xpose.msra.mxu0 %v478
        %541 = vmatmul.f32.gmra.mxu0 %v475
        %v542 = vpop.f32.mrf.mxu0
        %v543 = vadd.f32 %v471, %v542
        %544 = vdwg.mxu0
        %v545 = vmax.f32 %v543, 0.0
        %546 = vst [vmem:[%s131] sm:$0xff] %v545
        %s547 = sand.u32 %s76, 1
        %s548 = scalar_lea.sflag [#allocation7], %s547
        %s549 = sand.u32 %s76, 1
        %s550 = smul.addr %s549, 8
        %s551 = scalar_lea.vmem [#allocation6], %s550
        // Predicated region
        $region269: #{tpu_custom_call.1} parent=27 // pred_check
          %p552 = pneg %p86
        $region270: #{tpu_custom_call.1} parent=27 // pred_check_branch
          %554 = sbr.rel (%p552) target = $region272
        $region271: #{tpu_custom_call.1} parent=27 // pred_region
          %556 = vsyncadd %s548, 0
          %s557 = smul.addr %s26, 8
          %s558 = scalar_lea.hbm %s4, %s557
          %s560 = sshll.u32 %s551, 4
          %s561 = int_to_ptr.vmem [resolvable:$true] %s560
          %s562 = sshll.u32 %s558, 4
          %s563 = int_to_ptr.hbm [resolvable:$true] %s562
          %565 = dma.vmem_to_hbm [thread:$0]  %s561, 128, %s563, %s548
        $region272: #{tpu_custom_call.1} parent=27 // pred_fallthru
          _
      $region28: #{tpu_custom_call.1} parent=5 // pred_fallthru
        _
      %p566 = scmp.le.s32.totalorder 2, %s21
      // Predicated region
      $region273: #{tpu_custom_call.1} parent=5 // pred_check
        %p567 = pneg %p566
      $region274: #{tpu_custom_call.1} parent=5 // pred_check_branch
        %569 = sbr.rel (%p567) target = $region276
      $region275: #{tpu_custom_call.1} parent=5 // pred_region
        %s570 = ssub.s32 %s21, 2
        // Predicated region
        $region277: #{tpu_custom_call.1} parent=275 // pred_check
          %p571 = pneg %p92
        $region278: #{tpu_custom_call.1} parent=275 // pred_check_branch
          %573 = sbr.rel (%p571) target = $region280
        $region279: #{tpu_custom_call.1} parent=275 // pred_region
          %s574 = sand.u32 %s77, 1
          %s575 = scalar_lea.sflag [#allocation7], %s574
          %s576 = sand.u32 %s77, 1
          %s577 = smul.addr %s576, 8
          %s578 = scalar_lea.vmem [#allocation6], %s577
          %580 = dma.done %s575, 128
        $region280: #{tpu_custom_call.1} parent=275 // pred_fallthru
          _
      $region276: #{tpu_custom_call.1} parent=5 // pred_fallthru
        _
    $region6: #{tpu_custom_call.1} parent=1 // loop_footer
      %s25 = sadd.s32 1, %s21
    $region7: #{tpu_custom_call.1} parent=1 // loop_footer_branch
      %20 = sbr.rel target = $region3
    $region8: #{tpu_custom_call.1} parent=1 // loop_exit
      _
    %581 = vsyncpa [#allocation7], 1
    %s582 = scalar_lea.sflag [#allocation7], 1
    %583 = vsyncpa %s582, 1
  %584 = vsyncmov [#allocation3]
  %s585 = vpop.sfrf %584
  %p586 = scmp.eq.s32.totalorder %s585, 0
  %p587 = pneg %p586
  %589 = shalt.err (%p587)

</llo_original>
